<compile_context>
chip_gen: v7x
topology: tpu7x:2x2x1
jax: 0.10.0
libtpu: 0.0.40
codegen_flags: <defaults>
</compile_context>

<pallas_src>
import jax
import jax.numpy as jnp
from jax.experimental import pallas as pl
from jax.experimental.pallas import tpu as pltpu

_LANE = 128


def _round_up(x, m):
    return (x + m - 1) // m * m


def _gaussian_membership_kernel(x_ref, a_ref, b_ref, o_ref):
    a = a_ref[...]                                    # (1, Dr) — broadcasts over rows
    b = b_ref[...]                                    # (1, Dr)
    b_c = jnp.maximum(b, jnp.float32(1e-8))
    # -1 / (2 * b_c^2): computed once on the (1, Dr) vector, exact reciprocal.
    scale = jnp.float32(-0.5) * pl.reciprocal(b_c * b_c, approx=False)
    diff = x_ref[...] - a                             # (tile_n, Dr)
    o_ref[...] = jnp.exp(diff * diff * scale)


def gaussian_membership(x, a, b, *, tile_n=512):
    """x: (N, D); a, b: (D,). Returns (N, D) f32 membership values."""
    N, D = x.shape
    x = x.astype(jnp.float32)
    a = a.astype(jnp.float32)
    b = b.astype(jnp.float32)

    # ---- make the last dim lane-dense (multiple of 128) ----
    if D % _LANE == 0:
        k, Dr, Nr = 1, D, N
        xr, ar, br = x, a, b
    elif _LANE % D == 0:
        # fold k rows into one lane-dense row of width k*D
        k = _LANE // D
        Dr = k * D
        n_fold = _round_up(N, k)
        xr = jnp.pad(x, ((0, n_fold - N), (0, 0))) if n_fold != N else x
        Nr = n_fold // k
        xr = xr.reshape(Nr, Dr)
        ar = jnp.tile(a, k)
        br = jnp.tile(b, k)
    else:
        # pad feature dim up to the next multiple of 128 (padding sliced off later)
        k = 1
        Dr = _round_up(D, _LANE)
        pad_d = Dr - D
        xr = jnp.pad(x, ((0, 0), (0, pad_d)))
        ar = jnp.pad(a, (0, pad_d))
        br = jnp.pad(b, (0, pad_d), constant_values=1.0)
        Nr = N

    # ---- pick the row tile: multiple of 8, capped by a conservative VMEM budget ----
    # bytes per grid step ~ 2 (double buffer) * (input + output) * tile_n * Dr * 4
    vmem_budget = 16 * 1024 * 1024          # headroom even for v7x's smaller VMEM
    bytes_per_row = 4 * Dr                  # f32
    max_rows_vmem = max(8, (vmem_budget // (4 * bytes_per_row)) // 8 * 8)
    tile_n = max(8, (int(tile_n) // 8) * 8)
    tile_n = min(tile_n, _round_up(Nr, 8), max_rows_vmem)

    nr_pad = _round_up(Nr, tile_n)
    if nr_pad != Nr:
        xr = jnp.pad(xr, ((0, nr_pad - Nr), (0, 0)))

    ar2 = ar.reshape(1, Dr)
    br2 = br.reshape(1, Dr)

    grid = (nr_pad // tile_n,)
    out = pl.pallas_call(
        _gaussian_membership_kernel,
        out_shape=jax.ShapeDtypeStruct((nr_pad, Dr), jnp.float32),
        grid_spec=pltpu.PrefetchScalarGridSpec(
            num_scalar_prefetch=0,
            grid=grid,
            in_specs=[
                pl.BlockSpec((tile_n, Dr), lambda i: (i, 0)),   # X tile
                pl.BlockSpec((1, Dr), lambda i: (0, 0)),        # a (broadcast)
                pl.BlockSpec((1, Dr), lambda i: (0, 0)),        # b (broadcast)
            ],
            out_specs=pl.BlockSpec((tile_n, Dr), lambda i: (i, 0)),
        ),
        compiler_params=pltpu.CompilerParams(
            dimension_semantics=("parallel",),
        ),
    )(xr, ar2, br2)

    # ---- undo packing / padding ----
    if k > 1:
        out = out.reshape(nr_pad * k, D)
    return out[:N, :D]


def gaussian_membership_ref(x, a, b):
    b_c = jnp.maximum(b, 1e-8)
    return jnp.exp(-(x - a[None, :]) ** 2 / (2.0 * b_c[None, :] ** 2))


if __name__ == "__main__":
    key = jax.random.PRNGKey(0)
    k_x, k_a, k_b = jax.random.split(key, 3)

    # Case 1: shapes consistent with the module (N x input_dim), D=32 -> row-folding path.
    N, input_dim = 8, 32
    x = jax.random.normal(k_x, (N, input_dim), dtype=jnp.float32)
    a = jax.random.normal(k_a, (input_dim,), dtype=jnp.float32)
    b = jnp.abs(jax.random.normal(k_b, (input_dim,), dtype=jnp.float32))

    out = jax.block_until_ready(gaussian_membership(x, a, b))
    ref = gaussian_membership_ref(x, a, b)
    assert out.shape == (N, input_dim)
    assert jnp.allclose(out, ref, atol=1e-6, rtol=1e-6), "mismatch vs reference (case 1)"

    # Case 2: N not a multiple of the tile and D needing lane padding.
    N2, D2 = 10, 24
    x2 = jax.random.normal(k_x, (N2, D2), dtype=jnp.float32)
    a2 = jax.random.normal(k_a, (D2,), dtype=jnp.float32)
    b2 = jnp.abs(jax.random.normal(k_b, (D2,), dtype=jnp.float32))

    out2 = jax.block_until_ready(gaussian_membership(x2, a2, b2))
    ref2 = gaussian_membership_ref(x2, a2, b2)
    assert out2.shape == (N2, D2)
    assert jnp.allclose(out2, ref2, atol=1e-6, rtol=1e-6), "mismatch vs reference (case 2)"

    print("KERNEL_OK")
</pallas_src>

<mosaic_0001>
module attributes {stable_mosaic.version = 11 : i64} {
  func.func @_gaussian_membership_kernel(%arg0: i32, %arg1: memref<8x128xf32, #tpu.memory_space<vmem>>, %arg2: memref<1x128xf32, #tpu.memory_space<vmem>>, %arg3: memref<1x128xf32, #tpu.memory_space<vmem>>, %arg4: memref<8x128xf32, #tpu.memory_space<vmem>>) attributes {dimension_semantics = [#tpu.dimension_semantics<parallel>], iteration_bounds = array<i64: 1>, scalar_prefetch = 0 : i64, scratch_operands = 0 : i64, tpu.core_type = #tpu.core_type<tc>, window_params = [{transform_indices = @transform_0, window_bounds = array<i64: 8, 128>}, {pipeline_mode = #tpu.pipeline_mode<synchronous>, transform_indices = @transform_1, window_bounds = array<i64: 1, 128>}, {pipeline_mode = #tpu.pipeline_mode<synchronous>, transform_indices = @transform_2, window_bounds = array<i64: 1, 128>}, {transform_indices = @transform_3, window_bounds = array<i64: 8, 128>}]} {
    %c0 = arith.constant 0 : index
    %c0_0 = arith.constant 0 : index
    %0 = vector.load %arg2[%c0, %c0_0] : memref<1x128xf32, #tpu.memory_space<vmem>>, vector<1x128xf32>
    %c0_1 = arith.constant 0 : index
    %c0_2 = arith.constant 0 : index
    %1 = vector.load %arg3[%c0_1, %c0_2] : memref<1x128xf32, #tpu.memory_space<vmem>>, vector<1x128xf32>
    %cst = arith.constant 9.99999993E-9 : f32
    %2 = vector.broadcast %cst : f32 to vector<1x128xf32>
    %3 = arith.maximumf %1, %2 : vector<1x128xf32>
    %4 = arith.mulf %3, %3 : vector<1x128xf32>
    %5 = tpu.reciprocal %4 : vector<1x128xf32> -> vector<1x128xf32>
    %cst_3 = arith.constant -5.000000e-01 : f32
    %6 = vector.broadcast %cst_3 : f32 to vector<1x128xf32>
    %7 = arith.mulf %6, %5 : vector<1x128xf32>
    %c0_4 = arith.constant 0 : index
    %c0_5 = arith.constant 0 : index
    %8 = vector.load %arg1[%c0_4, %c0_5] : memref<8x128xf32, #tpu.memory_space<vmem>>, vector<8x128xf32>
    %9 = vector.broadcast %0 : vector<1x128xf32> to vector<8x128xf32>
    %10 = arith.subf %8, %9 : vector<8x128xf32>
    %11 = arith.mulf %10, %10 : vector<8x128xf32>
    %12 = vector.broadcast %7 : vector<1x128xf32> to vector<8x128xf32>
    %13 = arith.mulf %11, %12 : vector<8x128xf32>
    %14 = math.exp %13 : vector<8x128xf32>
    %c0_6 = arith.constant 0 : index
    %c0_7 = arith.constant 0 : index
    %15 = vector.load %arg4[%c0_6, %c0_7] : memref<8x128xf32, #tpu.memory_space<vmem>>, vector<8x128xf32>
    tpu.vector_store %arg4[%c0_6, %c0_7], %14 {strides = array<i32>} : memref<8x128xf32, #tpu.memory_space<vmem>>, vector<8x128xf32>,
    return
  }
  func.func @transform_0(%arg0: i32) -> (i32, i32) {
    %c0_i32 = arith.constant 0 : i32
    %c0_i32_0 = arith.constant 0 : i32
    return %arg0, %c0_i32 : i32, i32
  }
  func.func @transform_1(%arg0: i32) -> (i32, i32) {
    %c0_i32 = arith.constant 0 : i32
    %c0_i32_0 = arith.constant 0 : i32
    %c0_i32_1 = arith.constant 0 : i32
    return %c0_i32, %c0_i32_0 : i32, i32
  }
  func.func @transform_2(%arg0: i32) -> (i32, i32) {
    %c0_i32 = arith.constant 0 : i32
    %c0_i32_0 = arith.constant 0 : i32
    %c0_i32_1 = arith.constant 0 : i32
    return %c0_i32, %c0_i32_0 : i32, i32
  }
  func.func @transform_3(%arg0: i32) -> (i32, i32) {
    %c0_i32 = arith.constant 0 : i32
    %c0_i32_0 = arith.constant 0 : i32
    return %arg0, %c0_i32 : i32, i32
  }
}

</mosaic_0001>

<llo_original>
// kernel: tpu_custom_call.1
$region0: #{tpu_custom_call.1}
  #allocation0 [shape = 'u32[]', space=smem, size = 0x4, offset = 0x4, fixed_abs, tag = 'smem constant byte address 0x4 - core index']
  #allocation1 [shape = 'u32[144,128]{1,0:T(1,128)}', space=vmem, size = 0x12000, scoped, tag = 'internal scratch']
  %s0 = inlined_call_operand.hbm [shape: f32[8,128], index: 0, kind: input, shape index: {}]
  %s1 = inlined_call_operand.vmem [shape: f32[1,128], index: 1, kind: input, shape index: {}]
  %s2 = inlined_call_operand.vmem [shape: f32[1,128], index: 2, kind: input, shape index: {}]
  %s3 = inlined_call_operand.hbm [shape: f32[8,128], index: 3, kind: output, shape index: {}]
  %s4 = sld [smem:[#allocation0]]
  $region26: #{tpu_custom_call.1} parent=0
    _
  %s6 = ssub.s32 1, %s4
  %s7 = scalar_select 0, %s6, %s4
  $region1: #{tpu_custom_call.1} parent=0
    #allocation2 [shape = 'u8[4096]{0}', space=vmem, size = 0x1000, scoped, tag = 'input window, operand 0, single buffered']
    #allocation3 [shape = 's32[1]{0}', space=sflag, size = 0x4, scoped, tag = 'scoped memory for tpu_custom_call.1']
    #allocation4 [shape = 's32[1]{0}', space=sflag, size = 0x4, scoped, tag = 'scoped memory for tpu_custom_call.1']
    #allocation5 [shape = 'u8[4096]{0}', space=vmem, size = 0x1000, scoped, tag = 'output window, operand 0, single buffered']
    %8 = vsyncpa [#allocation3], 0
    %9 = vsyncpa [#allocation4], 0
    // Predicated region
    $region2: #{tpu_custom_call.1} parent=1 // pred_check
      _
    $region3: #{tpu_custom_call.1} parent=1 // pred_check_branch
      %11 = sbr.rel (0) target = $region5
    $region4: #{tpu_custom_call.1} parent=1 // pred_region
      %s13 = ssub.s32 128, 128
      %14 = vsyncadd [#allocation3], %s13
      %s16 = sshll.u32 [#allocation2], 4
      %s17 = int_to_ptr.vmem [resolvable:$true] %s16
      %19 = dma.hbm_to_vmem [thread:$0]  %s0, 128, %s17, [#allocation3]
    $region5: #{tpu_custom_call.1} parent=1 // pred_fallthru
      _
    // Predicated region
    $region6: #{tpu_custom_call.1} parent=1 // pred_check
      _
    $region7: #{tpu_custom_call.1} parent=1 // pred_check_branch
      %21 = sbr.rel (0) target = $region9
    $region8: #{tpu_custom_call.1} parent=1 // pred_region
      _
    $region9: #{tpu_custom_call.1} parent=1 // pred_fallthru
      _
    // Predicated region
    $region10: #{tpu_custom_call.1} parent=1 // pred_check
      _
    $region11: #{tpu_custom_call.1} parent=1 // pred_check_branch
      %23 = sbr.rel (0) target = $region13
    $region12: #{tpu_custom_call.1} parent=1 // pred_region
      _
    $region13: #{tpu_custom_call.1} parent=1 // pred_fallthru
      _
    // Predicated region
    $region14: #{tpu_custom_call.1} parent=1 // pred_check
      _
    $region15: #{tpu_custom_call.1} parent=1 // pred_check_branch
      %25 = sbr.rel (0) target = $region17
    $region16: #{tpu_custom_call.1} parent=1 // pred_region
      %26 = dma.done [#allocation3], 128
    $region17: #{tpu_custom_call.1} parent=1 // pred_fallthru
      _
    %v27 = vld [vmem:[%s1] sm:$0x1]
    %v28 = vld [vmem:[%s2] sm:$0x1]
    %v29 = vmax.f32 %v28, 1e-08
    %v30 = vmul.f32 %v29, %v29
    %v31 = vrcp.pop %v30
    %v32 = vmul.f32 %v31, -0.5
    %v33 = vld [vmem:[#allocation2] sm:$0xff]
    %v35 = vlaneseq
    %v36 = vshrl.u32 %v35, 7
    %v37 = vsub.s32 0, %v36
    %v38 = vrot.slane %v27, %v37
    %v40 = vsub.f32 %v33, %v38
    %v41 = vmul.f32 %v40, %v40
    %v43 = vlaneseq
    %v44 = vshrl.u32 %v43, 7
    %v45 = vsub.s32 0, %v44
    %v46 = vrot.slane %v32, %v45
    %v48 = vmul.f32 %v41, %v46
    %v49 = vmul.f32 %v48, 1.442695
    %v50 = vpow.pop %v49
    %51 = vst [vmem:[#allocation5] sm:$0xff] %v50
    // Predicated region
    $region18: #{tpu_custom_call.1} parent=1 // pred_check
      _
    $region19: #{tpu_custom_call.1} parent=1 // pred_check_branch
      %53 = sbr.rel (0) target = $region21
    $region20: #{tpu_custom_call.1} parent=1 // pred_region
      %s55 = ssub.s32 128, 128
      %56 = vsyncadd [#allocation4], %s55
      %s58 = sshll.u32 [#allocation5], 4
      %s59 = int_to_ptr.vmem [resolvable:$true] %s58
      %61 = dma.vmem_to_hbm [thread:$0]  %s59, 128, %s3, [#allocation4]
    $region21: #{tpu_custom_call.1} parent=1 // pred_fallthru
      _
    // Predicated region
    $region22: #{tpu_custom_call.1} parent=1 // pred_check
      _
    $region23: #{tpu_custom_call.1} parent=1 // pred_check_branch
      %63 = sbr.rel (0) target = $region25
    $region24: #{tpu_custom_call.1} parent=1 // pred_region
      %64 = dma.done [#allocation4], 128
    $region25: #{tpu_custom_call.1} parent=1 // pred_fallthru
      _
    %65 = vsyncpa [#allocation3], 1
    %66 = vsyncpa [#allocation4], 1

</llo_original>
